<compile_context>
chip_gen: v6e
topology: v6e:2x2x1
jax: 0.10.0
libtpu: 0.0.40
codegen_flags: <defaults>
</compile_context>

<pallas_src>
import functools
import math

import numpy as np
import jax
import jax.numpy as jnp
from jax.experimental import pallas as pl
from jax.experimental.pallas import tpu as pltpu

_MATMUL_DTYPE = jnp.bfloat16     # MXU input dtype; accumulation is always f32.
_ACT_DTYPE = jnp.bfloat16        # inter-kernel activation storage dtype.
_NEG_INF = -1e9
_VMEM_LIMIT = 48 * 1024 * 1024   # safe on v5e/v6e (128 MiB) and v7x (64 MiB).


# ------------------------- helpers -------------------------

def _tile(dim, target, align):
    """Largest tile <= target that divides dim and is a multiple of align.

    Falls back to the full dim (always legal: block == full array dim)."""
    if dim <= target or dim % align != 0:
        return dim
    t = (target // align) * align
    while t >= align:
        if dim % t == 0:
            return t
        t -= align
    return dim


def _pad_cols(w, b, mult=128):
    """Pad the output (column) dim of a weight/bias pair to a multiple of mult."""
    n = w.shape[1]
    pad = (-n) % mult
    if pad == 0:
        return w, b
    w = jnp.pad(w, ((0, 0), (0, pad)))
    b = jnp.pad(b, ((0, pad),))
    return w, b


# ------------------------- Pallas kernels -------------------------

def _linear_kernel(x_ref, w_ref, b_ref, o_ref, acc_ref, *, activation):
    @pl.when(pl.program_id(2) == 0)
    def _init():
        acc_ref[...] = jnp.zeros_like(acc_ref)

    x = x_ref[...]
    w = w_ref[...]
    if x.dtype != _MATMUL_DTYPE:
        x = x.astype(_MATMUL_DTYPE)
    if w.dtype != _MATMUL_DTYPE:
        w = w.astype(_MATMUL_DTYPE)
    acc_ref[...] += jnp.dot(x, w, preferred_element_type=jnp.float32)

    @pl.when(pl.program_id(2) == pl.num_programs(2) - 1)
    def _finalize():
        y = acc_ref[...] + b_ref[...].astype(jnp.float32)
        if activation == "relu":
            y = jnp.maximum(y, 0.0)
        o_ref[...] = y.astype(o_ref.dtype)


def _ffn_kernel(x_ref, w1_ref, b1_ref, w2_ref, b2_ref, o_ref, acc_ref):
    # Fused w1 -> ReLU -> w2, tiled over the feedforward dim (f32 accumulator):
    # the (tm, tf) intermediate never leaves VMEM and the per-step working set
    # stays bounded for v7x's 64 MiB VMEM.
    f = pl.program_id(1)

    @pl.when(f == 0)
    def _init():
        acc_ref[...] = jnp.zeros_like(acc_ref)

    x = x_ref[...]
    if x.dtype != _MATMUL_DTYPE:
        x = x.astype(_MATMUL_DTYPE)
    h = jnp.dot(x, w1_ref[...], preferred_element_type=jnp.float32)
    h = jnp.maximum(h + b1_ref[...].astype(jnp.float32), 0.0)
    acc_ref[...] += jnp.dot(h.astype(_MATMUL_DTYPE), w2_ref[...],
                            preferred_element_type=jnp.float32)

    @pl.when(f == pl.num_programs(1) - 1)
    def _finalize():
        o_ref[...] = (acc_ref[...] + b2_ref[...].astype(jnp.float32)).astype(o_ref.dtype)


def _add_layernorm_kernel(x_ref, r_ref, w_ref, b_ref, o_ref):
    # LN(x + residual) with f32 statistics; bf16 in / bf16 out.
    x = x_ref[...].astype(jnp.float32) + r_ref[...].astype(jnp.float32)
    mean = jnp.mean(x, axis=-1, keepdims=True)
    var = jnp.mean((x - mean) ** 2, axis=-1, keepdims=True)
    y = (x - mean) * jax.lax.rsqrt(var + 1e-5)
    o_ref[...] = (y * w_ref[...] + b_ref[...]).astype(o_ref.dtype)


def _flash_attn_kernel(am_ref, kp_ref, q_ref, k_ref, v_ref, o_ref,
                       m_sc, l_sc, acc_sc, *, scale):
    # One (batch, head, q-tile) per outer grid point; Sk tiled on the innermost
    # ("arbitrary") axis with an online softmax.  Masks are combined on the VPU
    # — no (N, Sq, Sk) replication in HBM.
    ki = pl.program_id(3)

    @pl.when(ki == 0)
    def _init():
        m_sc[...] = jnp.full_like(m_sc, -jnp.inf)
        l_sc[...] = jnp.zeros_like(l_sc)
        acc_sc[...] = jnp.zeros_like(acc_sc)

    q = q_ref[0, 0]          # (tq, hd)  bf16
    k = k_ref[0, 0]          # (tks, hd) bf16
    v = v_ref[0, 0]          # (tks, hd) bf16

    s = jax.lax.dot_general(q, k, (((1,), (1,)), ((), ())),
                            preferred_element_type=jnp.float32)      # (tq, tks)
    s = s * scale
    s = s + am_ref[...].astype(jnp.float32)                          # (tq, tks)
    s = s + kp_ref[0].astype(jnp.float32)                            # (1, tks) bcast

    m_new = jnp.maximum(m_sc[...], jnp.max(s, axis=-1, keepdims=True))
    alpha = jnp.exp(m_sc[...] - m_new)
    p = jnp.exp(s - m_new)
    l_sc[...] = alpha * l_sc[...] + jnp.sum(p, axis=-1, keepdims=True)
    acc_sc[...] = alpha * acc_sc[...] + jnp.dot(
        p.astype(_MATMUL_DTYPE), v, preferred_element_type=jnp.float32)
    m_sc[...] = m_new

    @pl.when(ki == pl.num_programs(3) - 1)
    def _finalize():
        # Exact division (not approx reciprocal) for parity with PyTorch softmax.
        o_ref[0, 0] = (acc_sc[...] / l_sc[...]).astype(o_ref.dtype)


# ------------------------- kernel wrappers -------------------------

def pallas_linear(x2d, w, b, activation=None, out_dtype=_ACT_DTYPE,
                  tm=256, tn=1024, tk=512):
    M, K = x2d.shape
    N = w.shape[1]
    tm = _tile(M, tm, 8)
    tn = _tile(N, tn, 128)
    tk = _tile(K, tk, 128)
    grid = (M // tm, N // tn, K // tk)
    kern = functools.partial(_linear_kernel, activation=activation)
    return pl.pallas_call(
        kern,
        out_shape=jax.ShapeDtypeStruct((M, N), out_dtype),
        grid=grid,
        in_specs=[pl.BlockSpec((tm, tk), lambda i, j, k: (i, k)),
                  pl.BlockSpec((tk, tn), lambda i, j, k: (k, j)),
                  pl.BlockSpec((1, tn), lambda i, j, k: (0, j))],
        out_specs=pl.BlockSpec((tm, tn), lambda i, j, k: (i, j)),
        scratch_shapes=[pltpu.VMEM((tm, tn), jnp.float32)],
        compiler_params=pltpu.CompilerParams(
            dimension_semantics=("parallel", "parallel", "arbitrary"),
            vmem_limit_bytes=_VMEM_LIMIT),
    )(x2d, w, b.reshape(1, N))


def pallas_ffn(x2d, w1, b1, w2, b2, tm=256, tf=512):
    M, E = x2d.shape
    F = w1.shape[1]
    tm = _tile(M, tm, 8)
    tf = _tile(F, tf, 128)
    grid = (M // tm, F // tf)
    return pl.pallas_call(
        _ffn_kernel,
        out_shape=jax.ShapeDtypeStruct((M, E), _ACT_DTYPE),
        grid=grid,
        in_specs=[pl.BlockSpec((tm, E), lambda i, f: (i, 0)),
                  pl.BlockSpec((E, tf), lambda i, f: (0, f)),
                  pl.BlockSpec((1, tf), lambda i, f: (0, f)),
                  pl.BlockSpec((tf, E), lambda i, f: (f, 0)),
                  pl.BlockSpec((1, E), lambda i, f: (0, 0))],
        out_specs=pl.BlockSpec((tm, E), lambda i, f: (i, 0)),
        scratch_shapes=[pltpu.VMEM((tm, E), jnp.float32)],
        compiler_params=pltpu.CompilerParams(
            dimension_semantics=("parallel", "arbitrary"),
            vmem_limit_bytes=_VMEM_LIMIT),
    )(x2d, w1, b1.reshape(1, F), w2, b2.reshape(1, E))


def pallas_add_layernorm(x2d, r2d, w, b, tm=512):
    M, E = x2d.shape
    tm = _tile(M, tm, 8)
    return pl.pallas_call(
        _add_layernorm_kernel,
        out_shape=jax.ShapeDtypeStruct((M, E), _ACT_DTYPE),
        grid=(M // tm,),
        in_specs=[pl.BlockSpec((tm, E), lambda i: (i, 0)),
                  pl.BlockSpec((tm, E), lambda i: (i, 0)),
                  pl.BlockSpec((1, E), lambda i: (0, 0)),
                  pl.BlockSpec((1, E), lambda i: (0, 0))],
        out_specs=pl.BlockSpec((tm, E), lambda i: (i, 0)),
        compiler_params=pltpu.CompilerParams(dimension_semantics=("parallel",)),
    )(x2d, r2d, w.reshape(1, E), b.reshape(1, E))


def pallas_attention(q, k, v, attn_mask, kpad_add, scale, tq_target=256, tk_target=512):
    # q: (N, H, Sq, hd) bf16; k/v: (N, H, Sk, hd) bf16
    # attn_mask: (Sq, Sk) additive f32 (shared across batch & heads)
    # kpad_add:  (N, 1, Sk) additive f32 (shared across heads & queries)
    N, H, Sq, hd = q.shape
    Sk = k.shape[2]
    tq = _tile(Sq, tq_target, 8)
    tks = _tile(Sk, tk_target, 128)
    grid = (N, H, Sq // tq, Sk // tks)
    kern = functools.partial(_flash_attn_kernel, scale=scale)
    return pl.pallas_call(
        kern,
        out_shape=jax.ShapeDtypeStruct((N, H, Sq, hd), _ACT_DTYPE),
        grid=grid,
        in_specs=[
            pl.BlockSpec((tq, tks), lambda n, h, qi, ki: (qi, ki)),
            pl.BlockSpec((1, 1, tks), lambda n, h, qi, ki: (n, 0, ki)),
            pl.BlockSpec((1, 1, tq, hd), lambda n, h, qi, ki: (n, h, qi, 0)),
            pl.BlockSpec((1, 1, tks, hd), lambda n, h, qi, ki: (n, h, ki, 0)),
            pl.BlockSpec((1, 1, tks, hd), lambda n, h, qi, ki: (n, h, ki, 0)),
        ],
        out_specs=pl.BlockSpec((1, 1, tq, hd), lambda n, h, qi, ki: (n, h, qi, 0)),
        scratch_shapes=[pltpu.VMEM((tq, 1), jnp.float32),
                        pltpu.VMEM((tq, 1), jnp.float32),
                        pltpu.VMEM((tq, hd), jnp.float32)],
        compiler_params=pltpu.CompilerParams(
            dimension_semantics=("parallel", "parallel", "parallel", "arbitrary")),
    )(attn_mask, kpad_add, q, k, v)


# ------------------------- model forward -------------------------

def mha_forward(x_q, x_kv, p, nhead, attn_mask, kpad_add):
    """PyTorch-style MultiheadAttention (fused in_proj, post out_proj)."""
    Sq, N, E = x_q.shape
    Sk = x_kv.shape[0]
    hd = E // nhead

    if x_q is x_kv:
        # Fused QKV projection: one (M, E) x (E, 3E) matmul.
        qkv = pallas_linear(x_q.reshape(Sq * N, E), p["wqkv"], p["bqkv"])
        qkv = jnp.transpose(qkv.reshape(Sq, N, 3, nhead, hd), (2, 1, 3, 0, 4))
        q, k, v = qkv[0], qkv[1], qkv[2]                      # (N, H, S, hd)
    else:
        # Cross-attention: Q projection + fused KV projection (pre-split weights).
        q = pallas_linear(x_q.reshape(Sq * N, E), p["wq"], p["bq"])
        kv = pallas_linear(x_kv.reshape(Sk * N, E), p["wkv"], p["bkv"])
        q = jnp.transpose(q.reshape(Sq, N, nhead, hd), (1, 2, 0, 3))
        kv = jnp.transpose(kv.reshape(Sk, N, 2, nhead, hd), (2, 1, 3, 0, 4))
        k, v = kv[0], kv[1]

    o = pallas_attention(q, k, v, attn_mask, kpad_add, 1.0 / math.sqrt(hd))
    o = jnp.transpose(o, (2, 0, 1, 3)).reshape(Sq * N, E)
    o = pallas_linear(o, p["wo"], p["bo"])
    return o.reshape(Sq, N, E)


def encoder_layer(x, p, nhead, attn_mask, kpad_add):
    # post-norm (norm_first=False), ReLU activation, dropout = identity
    S, N, E = x.shape
    M = S * N
    a = mha_forward(x, x, p["attn"], nhead, attn_mask, kpad_add)
    x2 = pallas_add_layernorm(x.reshape(M, E), a.reshape(M, E), p["ln1_w"], p["ln1_b"])
    h = pallas_ffn(x2, p["w1"], p["b1"], p["w2"], p["b2"])
    x2 = pallas_add_layernorm(x2, h, p["ln2_w"], p["ln2_b"])
    return x2.reshape(S, N, E)


def decoder_layer(x, mem, p, nhead, tgt_attn_mask, tgt_kpad_add,
                  mem_attn_mask, mem_kpad_add):
    S, N, E = x.shape
    M = S * N
    a = mha_forward(x, x, p["self_attn"], nhead, tgt_attn_mask, tgt_kpad_add)
    x = pallas_add_layernorm(x.reshape(M, E), a.reshape(M, E),
                             p["ln1_w"], p["ln1_b"]).reshape(S, N, E)
    c = mha_forward(x, mem, p["cross_attn"], nhead, mem_attn_mask, mem_kpad_add)
    x2 = pallas_add_layernorm(x.reshape(M, E), c.reshape(M, E), p["ln2_w"], p["ln2_b"])
    h = pallas_ffn(x2, p["w1"], p["b1"], p["w2"], p["b2"])
    x2 = pallas_add_layernorm(x2, h, p["ln3_w"], p["ln3_b"])
    return x2.reshape(S, N, E)


def _kpad_additive(key_padding_mask):
    # (N, Sk) bool (True = pad) -> (N, 1, Sk) additive f32; combined per-head
    # inside the attention kernel — never replicated to (N, Sq, Sk) in HBM.
    return jnp.where(key_padding_mask, _NEG_INF, 0.0)[:, None, :].astype(jnp.float32)


def seq2seq_forward(params, src, tgt, src_mask, tgt_mask,
                    src_padding_mask, tgt_padding_mask, memory_key_padding_mask,
                    enc_args_list, nhead, emb_size,
                    memory_transformation="projection"):
    S_src, N, total = src.shape
    S_tgt = tgt.shape[0]

    # positional encodings (dropout is identity in eval mode)
    src_emb = (src + params["pe_src"][:S_src]).astype(_ACT_DTYPE)
    tok = jnp.take(params["tgt_embedding"], tgt.astype(jnp.int32), axis=0) * math.sqrt(emb_size)
    tgt_emb = (tok + params["pe_tgt"][:S_tgt]).astype(_ACT_DTYPE)

    # encoder masks built once, shared by all encoders / layers
    src_attn_mask = src_mask.astype(jnp.float32)
    src_kpad_add = _kpad_additive(src_padding_mask)

    # multi-encoder over feature slices
    start = 0
    mem_parts = []
    for enc_args, layers in zip(enc_args_list, params["encoders"]):
        end = start + enc_args["d_model"]
        part = src_emb[:, :, start:end]
        for lp in layers:
            part = encoder_layer(part, lp, enc_args["nhead"], src_attn_mask, src_kpad_add)
        mem_parts.append(part)
        start = end
    memory = jnp.concatenate(mem_parts, axis=-1)             # (S_src, N, total) bf16

    if memory_transformation == "projection":
        ret = pallas_linear(memory.reshape(S_src * N, total),
                            params["mem_w"], params["mem_b"]).reshape(S_src, N, emb_size)
    elif memory_transformation == "attention":
        # TODO(synk): 'attention' memory transformation uses a GRU recurrence; no clean Pallas equivalent here.
        raise NotImplementedError("memory_transformation='attention' (GRU) is not implemented")
    else:
        if total != emb_size:
            raise ValueError("passthrough memory requires sum(d_model_i) == emb_size")
        ret = memory

    # decoder masks (built once)
    tgt_attn_mask = tgt_mask.astype(jnp.float32)
    tgt_kpad_add = _kpad_additive(tgt_padding_mask)
    mem_attn_mask = jnp.zeros((S_tgt, S_src), jnp.float32)
    mem_kpad_add = _kpad_additive(memory_key_padding_mask)

    x = tgt_emb
    for lp in params["decoder"]:
        x = decoder_layer(x, ret, lp, nhead, tgt_attn_mask, tgt_kpad_add,
                          mem_attn_mask, mem_kpad_add)

    # generator (vocab padded to a 128-multiple at init → lane-dense tiles)
    logits = pallas_linear(x.reshape(S_tgt * N, emb_size),
                           params["gen_w"], params["gen_b"], out_dtype=jnp.float32)
    vocab = params["tgt_vocab_size"]
    return logits[:, :vocab].reshape(S_tgt, N, vocab)


# ------------------------- parameter init -------------------------

def make_pos_embedding(maxlen, emb_size):
    den = np.exp(-np.arange(0, emb_size, 2) * math.log(10000) / emb_size)
    pos = np.arange(0, maxlen).reshape(maxlen, 1)
    pe = np.zeros((maxlen, emb_size), np.float32)
    pe[:, 0::2] = np.sin(pos * den)
    if emb_size % 2 == 1:
        den = den[:-1]
    pe[:, 1::2] = np.cos(pos * den)
    return jnp.asarray(pe[:, None, :])          # (maxlen, 1, emb_size)


def _w(key, shape):
    return (jax.random.normal(key, shape, jnp.float32) * 0.02).astype(_MATMUL_DTYPE)


def init_self_mha_params(key, E):
    k1, k2 = jax.random.split(key, 2)
    return {
        "wqkv": _w(k1, (E, 3 * E)),
        "bqkv": jnp.zeros((3 * E,), jnp.float32),
        "wo": _w(k2, (E, E)),
        "bo": jnp.zeros((E,), jnp.float32),
    }


def init_cross_mha_params(key, E):
    k1, k2, k3 = jax.random.split(key, 3)
    return {
        "wq": _w(k1, (E, E)),
        "bq": jnp.zeros((E,), jnp.float32),
        "wkv": _w(k2, (E, 2 * E)),
        "bkv": jnp.zeros((2 * E,), jnp.float32),
        "wo": _w(k3, (E, E)),
        "bo": jnp.zeros((E,), jnp.float32),
    }


def init_enc_layer(key, d, ff):
    k1, k2, k3 = jax.random.split(key, 3)
    return {
        "attn": init_self_mha_params(k1, d),
        "w1": _w(k2, (d, ff)), "b1": jnp.zeros((ff,), jnp.float32),
        "w2": _w(k3, (ff, d)), "b2": jnp.zeros((d,), jnp.float32),
        "ln1_w": jnp.ones((d,), jnp.float32), "ln1_b": jnp.zeros((d,), jnp.float32),
        "ln2_w": jnp.ones((d,), jnp.float32), "ln2_b": jnp.zeros((d,), jnp.float32),
    }


def init_dec_layer(key, d, ff):
    k1, k2, k3, k4 = jax.random.split(key, 4)
    return {
        "self_attn": init_self_mha_params(k1, d),
        "cross_attn": init_cross_mha_params(k2, d),
        "w1": _w(k3, (d, ff)), "b1": jnp.zeros((ff,), jnp.float32),
        "w2": _w(k4, (ff, d)), "b2": jnp.zeros((d,), jnp.float32),
        "ln1_w": jnp.ones((d,), jnp.float32), "ln1_b": jnp.zeros((d,), jnp.float32),
        "ln2_w": jnp.ones((d,), jnp.float32), "ln2_b": jnp.zeros((d,), jnp.float32),
        "ln3_w": jnp.ones((d,), jnp.float32), "ln3_b": jnp.zeros((d,), jnp.float32),
    }


def init_params(key, enc_args_list, num_decoder_layers, emb_size, nhead,
                tgt_vocab_size, dim_feedforward, maxlen=512):
    total = sum(e["d_model"] for e in enc_args_list)
    n_keys = sum(e["num_layers"] for e in enc_args_list) + num_decoder_layers + 3
    kit = iter(jax.random.split(key, n_keys))
    params = {"encoders": []}
    for e in enc_args_list:
        layers = [init_enc_layer(next(kit), e["d_model"], e["dim_feedforward"])
                  for _ in range(e["num_layers"])]
        params["encoders"].append(layers)
    params["decoder"] = [init_dec_layer(next(kit), emb_size, dim_feedforward)
                         for _ in range(num_decoder_layers)]
    params["mem_w"] = _w(next(kit), (total, emb_size))
    params["mem_b"] = jnp.zeros((emb_size,), jnp.float32)
    gen_w = _w(next(kit), (emb_size, tgt_vocab_size))
    gen_b = jnp.zeros((tgt_vocab_size,), jnp.float32)
    # Pad vocab columns to a 128-multiple (lane-dense generator tiles; avoids
    # the oversized full-dim fallback block for unaligned vocab sizes).
    params["gen_w"], params["gen_b"] = _pad_cols(gen_w, gen_b, 128)
    params["tgt_vocab_size"] = tgt_vocab_size
    params["tgt_embedding"] = jax.random.normal(next(kit), (tgt_vocab_size, emb_size),
                                                jnp.float32) * 0.02
    params["pe_src"] = make_pos_embedding(maxlen, total)
    params["pe_tgt"] = make_pos_embedding(maxlen, emb_size)
    return params


# ------------------------- demo -------------------------

if __name__ == "__main__":
    enc_args_list = [
        dict(d_model=16, nhead=2, dim_feedforward=32, num_layers=1),
        dict(d_model=16, nhead=2, dim_feedforward=32, num_layers=1),
    ]
    emb_size = 32
    nhead = 2
    num_decoder_layers = 1
    tgt_vocab_size = 16
    dim_feedforward = 64
    S_src, S_tgt, N = 8, 8, 2
    total = sum(e["d_model"] for e in enc_args_list)

    root = jax.random.PRNGKey(0)
    kp, kx, kt = jax.random.split(root, 3)

    params = init_params(kp, enc_args_list, num_decoder_layers, emb_size, nhead,
                         tgt_vocab_size, dim_feedforward)

    src = jax.random.normal(kx, (S_src, N, total), jnp.float32)
    tgt = jax.random.randint(kt, (S_tgt, N), 0, tgt_vocab_size)
    src_mask = jnp.zeros((S_src, S_src), jnp.float32)
    causal = jnp.triu(jnp.ones((S_tgt, S_tgt), jnp.bool_), k=1)
    tgt_mask = jnp.where(causal, _NEG_INF, 0.0).astype(jnp.float32)
    src_padding_mask = jnp.zeros((N, S_src), jnp.bool_)
    tgt_padding_mask = jnp.zeros((N, S_tgt), jnp.bool_)
    memory_key_padding_mask = jnp.zeros((N, S_src), jnp.bool_)

    logits = seq2seq_forward(params, src, tgt, src_mask, tgt_mask,
                             src_padding_mask, tgt_padding_mask, memory_key_padding_mask,
                             enc_args_list, nhead, emb_size,
                             memory_transformation="projection")
    jax.block_until_ready(logits)
    assert logits.shape == (S_tgt, N, tgt_vocab_size)
    assert bool(jnp.all(jnp.isfinite(logits)))
    print("KERNEL_OK")
</pallas_src>

<mosaic_0001>
module attributes {stable_mosaic.version = 11 : i64} {
  func.func @_linear_kernel(%arg0: i32, %arg1: i32, %arg2: i32, %arg3: memref<16x16xbf16, #tpu.memory_space<vmem>>, %arg4: memref<16x48xbf16, #tpu.memory_space<vmem>>, %arg5: memref<1x48xf32, #tpu.memory_space<vmem>>, %arg6: memref<16x48xbf16, #tpu.memory_space<vmem>>, %arg7: memref<16x48xf32, #tpu.memory_space<vmem>>) attributes {dimension_semantics = [#tpu.dimension_semantics<parallel>, #tpu.dimension_semantics<parallel>, #tpu.dimension_semantics<arbitrary>], iteration_bounds = array<i64: 1, 1, 1>, scalar_prefetch = 0 : i64, scratch_operands = 1 : i64, tpu.core_type = #tpu.core_type<tc>, window_params = [{transform_indices = @transform_0, window_bounds = array<i64: 16, 16>}, {transform_indices = @transform_1, window_bounds = array<i64: 16, 48>}, {transform_indices = @transform_2, window_bounds = array<i64: 1, 48>}, {transform_indices = @transform_3, window_bounds = array<i64: 16, 48>}]} {
    %c0_i32 = arith.constant 0 : i32
    %0 = arith.cmpi eq, %arg2, %c0_i32 : i32
    %1 = arith.extui %0 : i1 to i32
    %c0_i32_0 = arith.constant 0 : i32
    %2 = arith.cmpi ne, %1, %c0_i32_0 : i32
    scf.if %2 {
      %cst_10 = arith.constant 0.000000e+00 : f32
      %12 = vector.broadcast %cst_10 : f32 to vector<16x48xf32>
      %c0_11 = arith.constant 0 : index
      %c0_12 = arith.constant 0 : index
      %13 = vector.load %arg7[%c0_11, %c0_12] : memref<16x48xf32, #tpu.memory_space<vmem>>, vector<16x48xf32>
      tpu.vector_store %arg7[%c0_11, %c0_12], %12 {strides = array<i32>} : memref<16x48xf32, #tpu.memory_space<vmem>>, vector<16x48xf32>,
    } else {
    }
    %c0 = arith.constant 0 : index
    %c0_1 = arith.constant 0 : index
    %3 = vector.load %arg3[%c0, %c0_1] : memref<16x16xbf16, #tpu.memory_space<vmem>>, vector<16x16xbf16>
    %c0_2 = arith.constant 0 : index
    %c0_3 = arith.constant 0 : index
    %4 = vector.load %arg4[%c0_2, %c0_3] : memref<16x48xbf16, #tpu.memory_space<vmem>>, vector<16x48xbf16>
    %c0_4 = arith.constant 0 : index
    %c0_5 = arith.constant 0 : index
    %5 = vector.load %arg7[%c0_4, %c0_5] : memref<16x48xf32, #tpu.memory_space<vmem>>, vector<16x48xf32>
    %cst = arith.constant dense<0.000000e+00> : vector<16x48xf32>
    %6 = tpu.matmul %3, %4, %cst {dimension_numbers = #tpu.dot_dimension_numbers<[1], [0], [0], [1], [0, 0, 1, 1], [], []>} : vector<16x16xbf16>, vector<16x48xbf16>, vector<16x48xf32> -> vector<16x48xf32>
    %7 = arith.addf %5, %6 : vector<16x48xf32>
    %c0_6 = arith.constant 0 : index
    %c0_7 = arith.constant 0 : index
    %8 = vector.load %arg7[%c0_6, %c0_7] : memref<16x48xf32, #tpu.memory_space<vmem>>, vector<16x48xf32>
    tpu.vector_store %arg7[%c0_6, %c0_7], %7 {strides = array<i32>} : memref<16x48xf32, #tpu.memory_space<vmem>>, vector<16x48xf32>,
    %c0_i32_8 = arith.constant 0 : i32
    %9 = arith.cmpi eq, %arg2, %c0_i32_8 : i32
    %10 = arith.extui %9 : i1 to i32
    %c0_i32_9 = arith.constant 0 : i32
    %11 = arith.cmpi ne, %10, %c0_i32_9 : i32
    scf.if %11 {
      %c0_10 = arith.constant 0 : index
      %c0_11 = arith.constant 0 : index
      %12 = vector.load %arg7[%c0_10, %c0_11] : memref<16x48xf32, #tpu.memory_space<vmem>>, vector<16x48xf32>
      %c0_12 = arith.constant 0 : index
      %c0_13 = arith.constant 0 : index
      %13 = vector.load %arg5[%c0_12, %c0_13] : memref<1x48xf32, #tpu.memory_space<vmem>>, vector<1x48xf32>
      %14 = vector.broadcast %13 : vector<1x48xf32> to vector<16x48xf32>
      %15 = arith.addf %12, %14 : vector<16x48xf32>
      %16 = arith.truncf %15 : vector<16x48xf32> to vector<16x48xbf16>
      %c0_14 = arith.constant 0 : index
      %c0_15 = arith.constant 0 : index
      %17 = vector.load %arg6[%c0_14, %c0_15] : memref<16x48xbf16, #tpu.memory_space<vmem>>, vector<16x48xbf16>
      tpu.vector_store %arg6[%c0_14, %c0_15], %16 {strides = array<i32>} : memref<16x48xbf16, #tpu.memory_space<vmem>>, vector<16x48xbf16>,
    } else {
    }
    return
  }
  func.func @transform_0(%arg0: i32, %arg1: i32, %arg2: i32) -> (i32, i32) {
    %c0_i32 = arith.constant 0 : i32
    return %arg0, %arg2 : i32, i32
  }
  func.func @transform_1(%arg0: i32, %arg1: i32, %arg2: i32) -> (i32, i32) {
    %c0_i32 = arith.constant 0 : i32
    return %arg2, %arg1 : i32, i32
  }
  func.func @transform_2(%arg0: i32, %arg1: i32, %arg2: i32) -> (i32, i32) {
    %c0_i32 = arith.constant 0 : i32
    %c0_i32_0 = arith.constant 0 : i32
    return %c0_i32, %arg1 : i32, i32
  }
  func.func @transform_3(%arg0: i32, %arg1: i32, %arg2: i32) -> (i32, i32) {
    %c0_i32 = arith.constant 0 : i32
    return %arg0, %arg1 : i32, i32
  }
}

</mosaic_0001>

<llo_original>
// kernel: tpu_custom_call.1
$region0: #{tpu_custom_call.1}
  #allocation0 [shape = 'u32[]', space=smem, size = 0x4, offset = 0x4, fixed_abs, tag = 'smem constant byte address 0x4 - core index']
  #allocation1 [shape = 'u32[144,128]{1,0:T(1,128)}', space=vmem, size = 0x12000, scoped, tag = 'internal scratch']
  #allocation2 [shape = 'f32[16,48]{1,0:T(8,128)}', space=vmem, size = 0x2000, scoped, tag = 'scratch operand']
  %s0 = inlined_call_operand.hbm [shape: bf16[16,16], index: 0, kind: input, shape index: {}]
  %s1 = inlined_call_operand.hbm [shape: bf16[16,48], index: 1, kind: input, shape index: {}]
  %s2 = inlined_call_operand.vmem [shape: f32[1,48], index: 2, kind: input, shape index: {}]
  %s3 = inlined_call_operand.hbm [shape: bf16[16,48], index: 3, kind: output, shape index: {}]
  %s4 = sld [smem:[#allocation0]]
  $region38: #{tpu_custom_call.1} parent=0
    _
  %s6 = ssub.s32 1, %s4
  %s7 = scalar_select 0, %s6, %s4
  $region1: #{tpu_custom_call.1} parent=0
    #allocation3 [shape = 'u8[4096]{0}', space=vmem, size = 0x1000, scoped, tag = 'input window, operand 0, single buffered']
    #allocation4 [shape = 's32[1]{0}', space=sflag, size = 0x4, scoped, tag = 'scoped memory for tpu_custom_call.1']
    #allocation5 [shape = 's32[1]{0}', space=sflag, size = 0x4, scoped, tag = 'scoped memory for tpu_custom_call.1']
    #allocation6 [shape = 'u8[4096]{0}', space=vmem, size = 0x1000, scoped, tag = 'input window, operand 1, single buffered']
    #allocation7 [shape = 's32[1]{0}', space=sflag, size = 0x4, scoped, tag = 'scoped memory for tpu_custom_call.1']
    #allocation8 [shape = 'u8[4096]{0}', space=vmem, size = 0x1000, scoped, tag = 'output window, operand 0, single buffered']
    %8 = vsyncpa [#allocation4], 0
    %9 = vsyncpa [#allocation7], 0
    %10 = vsyncpa [#allocation5], 0
    // Predicated region
    $region2: #{tpu_custom_call.1} parent=1 // pred_check
      _
    $region3: #{tpu_custom_call.1} parent=1 // pred_check_branch
      %12 = sbr.rel (0) target = $region5
    $region4: #{tpu_custom_call.1} parent=1 // pred_region
      %s14 = ssub.s32 128, 128
      %15 = vsyncadd [#allocation4], %s14
      %s16 = sshll.u32 [#allocation3], 4
      %s17 = int_to_ptr.vmem [resolvable:$true] %s16
      %22 = dma.hbm_to_vmem [thread:$0]  %s0, 128, %s17, [#allocation4], 64, 64, 4
    $region5: #{tpu_custom_call.1} parent=1 // pred_fallthru
      _
    // Predicated region
    $region6: #{tpu_custom_call.1} parent=1 // pred_check
      _
    $region7: #{tpu_custom_call.1} parent=1 // pred_check_branch
      %24 = sbr.rel (0) target = $region9
    $region8: #{tpu_custom_call.1} parent=1 // pred_region
      %s26 = ssub.s32 128, 128
      %27 = vsyncadd [#allocation7], %s26
      %s28 = sshll.u32 [#allocation6], 4
      %s29 = int_to_ptr.vmem [resolvable:$true] %s28
      %34 = dma.hbm_to_vmem [thread:$0]  %s1, 128, %s29, [#allocation7], 64, 64, 4
    $region9: #{tpu_custom_call.1} parent=1 // pred_fallthru
      _
    // Predicated region
    $region10: #{tpu_custom_call.1} parent=1 // pred_check
      _
    $region11: #{tpu_custom_call.1} parent=1 // pred_check_branch
      %36 = sbr.rel (0) target = $region13
    $region12: #{tpu_custom_call.1} parent=1 // pred_region
      _
    $region13: #{tpu_custom_call.1} parent=1 // pred_fallthru
      _
    // Predicated region
    $region14: #{tpu_custom_call.1} parent=1 // pred_check
      _
    $region15: #{tpu_custom_call.1} parent=1 // pred_check_branch
      %38 = sbr.rel (0) target = $region17
    $region16: #{tpu_custom_call.1} parent=1 // pred_region
      %39 = dma.done [#allocation4], 128
    $region17: #{tpu_custom_call.1} parent=1 // pred_fallthru
      _
    // Predicated region
    $region18: #{tpu_custom_call.1} parent=1 // pred_check
      _
    $region19: #{tpu_custom_call.1} parent=1 // pred_check_branch
      %41 = sbr.rel (0) target = $region21
    $region20: #{tpu_custom_call.1} parent=1 // pred_region
      %42 = dma.done [#allocation7], 128
    $region21: #{tpu_custom_call.1} parent=1 // pred_fallthru
      _
    %p44 = scmp.eq.s32.totalorder 0, 0
    // Predicated region
    $region22: #{tpu_custom_call.1} parent=1 // pred_check
      %p45 = pneg %p44
    $region23: #{tpu_custom_call.1} parent=1 // pred_check_branch
      %47 = sbr.rel (%p45) target = $region25
    $region24: #{tpu_custom_call.1} parent=1 // pred_region
      %vm48 = vcmask 392192
      %49 = vst.msk [vmem:[#allocation2] sm:$0xff] %vm48, 0.0
      %50 = vst.msk [vmem:[#allocation2 + $0x8] sm:$0xff] %vm48, 0.0
    $region25: #{tpu_custom_call.1} parent=1 // pred_fallthru
      _
    %v51 = vld [vmem:[#allocation3] sm:$0xf]
    %v52 = vld [vmem:[#allocation3 + $0x4] sm:$0xf]
    %v53 = vld [vmem:[#allocation6] sm:$0xf]
    %v54 = vld [vmem:[#allocation6 + $0x4] sm:$0xf]
    %v55 = vld [vmem:[#allocation2] sm:$0xff]
    %v56 = vld [vmem:[#allocation2 + $0x8] sm:$0xff]
    %v59 = vunpack.c.l.b16 %v51
    %v60 = vunpack.c.l.b16 %v52
    %v61 = vpack.c.b16 %v60, %v59
    %v64 = vunpack.c.l.b16 %v53
    %v65 = vunpack.c.l.b16 %v54
    %v66 = vpack.c.b16 %v65, %v64
    %vm68 = vcmask 130048
    %v70 = vsel %vm68, %v61, 0
    %72 = vmatprep.subr.bf16.mxu0 0
    %73 = vmatpush1.bf16.msra.mxu0 0
    %74 = vmatprep.subr.bf16.mxu0 0
    %75 = vmatpush1.bf16.msra.mxu0 0
    %76 = vmatprep.subr.bf16.mxu0 0
    %77 = vmatpush1.bf16.msra.mxu0 0
    %78 = vmatprep.subr.bf16.mxu0 0
    %79 = vmatpush1.bf16.msra.mxu0 0
    %80 = vmatprep.subr.bf16.mxu0 0
    %81 = vmatpush1.bf16.msra.mxu0 0
    %82 = vmatprep.subr.bf16.mxu0 0
    %83 = vmatpush1.bf16.msra.mxu0 0
    %84 = vmatprep.subr.bf16.mxu0 0
    %85 = vmatpush1.bf16.msra.mxu0 0
    %86 = vmatprep.subr.bf16.mxu0 0
    %87 = vmatpush1.bf16.msra.mxu0 %v66
    %88 = vmatprep.subr.bf16.mxu0 0
    %89 = vmatpush2.bf16.msra.mxu0 0
    %90 = vmatprep.subr.bf16.mxu0 0
    %91 = vmatpush2.bf16.msra.mxu0 0
    %92 = vmatprep.subr.bf16.mxu0 0
    %93 = vmatpush2.bf16.msra.mxu0 0
    %94 = vmatprep.subr.bf16.mxu0 0
    %95 = vmatpush2.bf16.msra.mxu0 0
    %96 = vmatprep.subr.bf16.mxu0 0
    %97 = vmatpush2.bf16.msra.mxu0 0
    %98 = vmatprep.subr.bf16.mxu0 0
    %99 = vmatpush2.bf16.msra.mxu0 0
    %100 = vmatprep.subr.bf16.mxu0 0
    %101 = vmatpush2.bf16.msra.mxu0 0
    %102 = vmatprep.subr.bf16.mxu0 0
    %103 = vmatpush2.bf16.msra.mxu0 0
    %104 = vmatprep.mubr.bf16.mxu0 0
    %105 = vmatmul.mubr.bf16.gmra.mxu0 %v70
    %v106 = vpop.f32.mrf.mxu0
    %v107 = vadd.f32 0.0, %v106
    %v108 = vpop.f32.mrf.mxu0
    %v109 = vpop.f32.mrf.mxu0
    %v110 = vadd.f32 0.0, %v109
    %v111 = vpop.f32.mrf.mxu0
    %112 = vdwg.mxu0
    %v113 = vadd.f32 %v55, %v107
    %v114 = vadd.f32 %v56, %v110
    %vm115 = vcmask 392192
    %116 = vst.msk [vmem:[#allocation2] sm:$0xff] %vm115, %v113
    %117 = vst.msk [vmem:[#allocation2 + $0x8] sm:$0xff] %vm115, %v114
    // Predicated region
    $region26: #{tpu_custom_call.1} parent=1 // pred_check
      %p118 = pneg %p44
    $region27: #{tpu_custom_call.1} parent=1 // pred_check_branch
      %120 = sbr.rel (%p118) target = $region29
    $region28: #{tpu_custom_call.1} parent=1 // pred_region
      %v121 = vld [vmem:[#allocation2] sm:$0xff]
      %v122 = vld [vmem:[#allocation2 + $0x8] sm:$0xff]
      %v123 = vld [vmem:[%s2] sm:$0x1]
      %v125 = vlaneseq
      %v126 = vshrl.u32 %v125, 7
      %v127 = vsub.s32 0, %v126
      %v128 = vrot.slane %v123, %v127
      %v130 = vadd.f32 %v121, %v128
      %v131 = vadd.f32 %v122, %v128
      %v132 = vpack.c.bf16 %v131, %v130
      %v134 = vunpack.c.l.b16 %v132
      %v135 = vunpack.c.h.b16 %v132
      %v136 = vpack.c.b16 %v134, %v134
      %v137 = vpack.c.b16 %v135, %v135
      %vm140 = vcmask 388096
      %141 = vst.msk [vmem:[#allocation8] sm:$0xf] %vm140, %v136
      %142 = vst.msk [vmem:[#allocation8 + $0x4] sm:$0xf] %vm140, %v137
    $region29: #{tpu_custom_call.1} parent=1 // pred_fallthru
      _
    // Predicated region
    $region30: #{tpu_custom_call.1} parent=1 // pred_check
      _
    $region31: #{tpu_custom_call.1} parent=1 // pred_check_branch
      %144 = sbr.rel (0) target = $region33
    $region32: #{tpu_custom_call.1} parent=1 // pred_region
      %s146 = ssub.s32 128, 128
      %147 = vsyncadd [#allocation5], %s146
      %s148 = sshll.u32 [#allocation8], 4
      %s149 = int_to_ptr.vmem [resolvable:$true] %s148
      %154 = dma.vmem_to_hbm [thread:$0]  %s149, 128, %s3, [#allocation5], 64, 64, 4
    $region33: #{tpu_custom_call.1} parent=1 // pred_fallthru
      _
    // Predicated region
    $region34: #{tpu_custom_call.1} parent=1 // pred_check
      _
    $region35: #{tpu_custom_call.1} parent=1 // pred_check_branch
      %156 = sbr.rel (0) target = $region37
    $region36: #{tpu_custom_call.1} parent=1 // pred_region
      %157 = dma.done [#allocation5], 128
    $region37: #{tpu_custom_call.1} parent=1 // pred_fallthru
      _
    %158 = vsyncpa [#allocation4], 1
    %159 = vsyncpa [#allocation7], 1
    %160 = vsyncpa [#allocation5], 1

</llo_original>
